<compile_context>
chip_gen: v6e
topology: v6e:2x2x1
jax: 0.10.0
libtpu: 0.0.40
codegen_flags: <defaults>
</compile_context>

<pallas_src>
import functools

import jax
import jax.numpy as jnp
from jax import lax
from jax.experimental import pallas as pl
from jax.experimental.pallas import tpu as pltpu


def _round_up(n, m):
    return ((n + m - 1) // m) * m


def _round_down_multiple(n, m):
    return (n // m) * m


def _valuenet_kernel(x_ref, w_ref, b_ref, o_ref, *, d_total, d_tile, mask_k):
    # x_ref: (TB, TD) VMEM   w_ref: (TD, 1) VMEM   b_ref: (1,) SMEM   o_ref: (TB, 1) VMEM
    k = pl.program_id(1)

    @pl.when(k == 0)
    def _():
        # The output block index is constant across k -> it stays resident in VMEM
        # and acts as the f32 accumulator.  Initialize it with the bias.
        o_ref[...] = jnp.full(o_ref.shape, b_ref[0], dtype=o_ref.dtype)

    x = x_ref[...]
    w = w_ref[...]
    if mask_k:
        # D is tiled and D % TD != 0: zero the overhanging columns/rows of the
        # boundary K block so stale VMEM contents (possibly NaN/Inf) never reach
        # the accumulator of valid output rows.
        base = k * d_tile
        col = lax.broadcasted_iota(jnp.int32, x.shape, 1) + base
        x = jnp.where(col < d_total, x, 0.0)
        row = lax.broadcasted_iota(jnp.int32, w.shape, 0) + base
        w = jnp.where(row < d_total, w, 0.0)

    # MXU-native (M, K) @ (K, N): no transpose of the large x tile.
    o_ref[...] += jnp.dot(x, w, preferred_element_type=jnp.float32)


def value_net_forward(x, weight, bias, *, target_buffer_bytes=4 << 20):
    """x: (B, D) f32, weight: (1, D) f32, bias: (1,) f32 -> (B, 1) f32."""
    B, D = x.shape
    w_col = weight.reshape(D, 1)          # (1, D) -> (D, 1); tiny one-time relayout
    b8 = _round_up(B, 8)

    # ---- Tile sizing from a per-buffer byte budget (fits every generation's default
    # scoped VMEM once double-buffered). ----
    rows_in_budget = _round_down_multiple(target_buffer_bytes // (4 * D), 128)
    if rows_in_budget >= 128:
        TB = min(rows_in_budget, 2048)    # full reduction dim in one block
        TD = D
    else:
        # D too wide even for a 128-row tile: tile the reduction dim as well.
        TB = 128
        TD = max(128, _round_down_multiple(target_buffer_bytes // (4 * TB), 128))

    if TB > b8:                           # never tile wider than the (padded) batch
        TB = b8
    if TB >= b8 and b8 >= 256:
        # Medium batch that would be a single tile: split in two so both v7x
        # TensorCores get work (harmless on single-TC v5e/v6e).
        TB = _round_up(b8 // 2, 128)

    num_b = pl.cdiv(B, TB)                # ragged last batch block: writes masked
    num_k = pl.cdiv(D, TD)
    mask_k = (num_k > 1) and (D % TD != 0)

    kernel = functools.partial(_valuenet_kernel, d_total=D, d_tile=TD, mask_k=mask_k)

    return pl.pallas_call(
        kernel,
        out_shape=jax.ShapeDtypeStruct((B, 1), jnp.float32),
        grid=(num_b, num_k),
        in_specs=[
            pl.BlockSpec((TB, TD), lambda i, k: (i, k)),            # stream x tiles
            pl.BlockSpec((TD, 1), lambda i, k: (k, 0)),             # small weight column
            pl.BlockSpec(memory_space=pltpu.MemorySpace.SMEM),      # bias scalar in SMEM
        ],
        out_specs=pl.BlockSpec((TB, 1), lambda i, k: (i, 0)),       # resident accumulator
        compiler_params=pltpu.CompilerParams(
            dimension_semantics=("parallel", "arbitrary"),
            vmem_limit_bytes=32 * 1024 * 1024,
        ),
        cost_estimate=pl.CostEstimate(
            flops=2 * B * D,
            transcendentals=0,
            bytes_accessed=4 * B * D + 4 * D + 4 * B,
        ),
    )(x, w_col, bias)


def norm_col_init(key, shape, std=1.0):
    """JAX replica of the PyTorch norm_col_init: x ~ N(0,1), then scale each row so
    its L2 norm equals `std`."""
    x = jax.random.normal(key, shape, dtype=jnp.float32)
    x = x * (std / jnp.sqrt(jnp.sum(x * x, axis=1, keepdims=True)))
    return x


if __name__ == "__main__":
    key = jax.random.PRNGKey(0)
    k_x, k_w, k_x2, k_w2 = jax.random.split(key, 4)

    # --- Small shape matching the module (critic head) ---
    batch, input_dim = 2, 32
    weight = norm_col_init(k_w, (1, input_dim), std=0.01)   # critic_linear.weight
    bias = jnp.zeros((1,), dtype=jnp.float32)                # critic_linear.bias
    x = jax.random.normal(k_x, (batch, input_dim), dtype=jnp.float32)

    value = jax.block_until_ready(value_net_forward(x, weight, bias))
    ref = x @ weight.T + bias
    assert value.shape == (batch, 1)
    assert jnp.allclose(value, ref, atol=1e-5, rtol=1e-4)

    # --- Extra coverage: multi-tile batch with a ragged last batch block ---
    b2, d2 = 300, 256
    w2 = norm_col_init(k_w2, (1, d2), std=0.01)
    x2 = jax.random.normal(k_x2, (b2, d2), dtype=jnp.float32)
    v2 = jax.block_until_ready(value_net_forward(x2, w2, bias))
    assert jnp.allclose(v2, x2 @ w2.T + bias, atol=1e-5, rtol=1e-4)

    # --- Extra coverage: forced reduction-dim (D) tiling incl. ragged K block ---
    b3, d3 = 130, 200
    w3 = norm_col_init(jax.random.PRNGKey(3), (1, d3), std=0.01)
    x3 = jax.random.normal(jax.random.PRNGKey(4), (b3, d3), dtype=jnp.float32)
    v3 = jax.block_until_ready(
        value_net_forward(x3, w3, bias, target_buffer_bytes=64 * 1024))
    assert jnp.allclose(v3, x3 @ w3.T + bias, atol=1e-5, rtol=1e-4)

    print("KERNEL_OK")
</pallas_src>

<mosaic_0001>
module attributes {stable_mosaic.version = 11 : i64} {
  func.func @_valuenet_kernel(%arg0: i32, %arg1: i32, %arg2: memref<8x32xf32, #tpu.memory_space<vmem>>, %arg3: memref<32x1xf32, #tpu.memory_space<vmem>>, %arg4: memref<1xf32, #tpu.memory_space<smem>>, %arg5: memref<8x1xf32, #tpu.memory_space<vmem>>) attributes {dimension_semantics = [#tpu.dimension_semantics<parallel>, #tpu.dimension_semantics<arbitrary>], iteration_bounds = array<i64: 1, 1>, scalar_prefetch = 0 : i64, scratch_operands = 0 : i64, tpu.core_type = #tpu.core_type<tc>, window_params = [{transform_indices = @transform_0, window_bounds = array<i64: 8, 32>}, {transform_indices = @transform_1, window_bounds = array<i64: 32, 1>}, {transform_indices = @transform_2, window_bounds = array<i64: 1>}, {transform_indices = @transform_3, window_bounds = array<i64: 8, 1>}]} {
    %c0_i32 = arith.constant 0 : i32
    %0 = arith.cmpi eq, %arg1, %c0_i32 : i32
    %1 = arith.extui %0 : i1 to i32
    %c0_i32_0 = arith.constant 0 : i32
    %2 = arith.cmpi ne, %1, %c0_i32_0 : i32
    scf.if %2 {
      %c0_8 = arith.constant 0 : index
      %9 = memref.load %arg4[%c0_8] : memref<1xf32, #tpu.memory_space<smem>>
      %10 = vector.broadcast %9 : f32 to vector<8x1xf32>
      %c0_9 = arith.constant 0 : index
      %c0_10 = arith.constant 0 : index
      %11 = vector.load %arg5[%c0_9, %c0_10] : memref<8x1xf32, #tpu.memory_space<vmem>>, vector<8x1xf32>
      tpu.vector_store %arg5[%c0_9, %c0_10], %10 {strides = array<i32>} : memref<8x1xf32, #tpu.memory_space<vmem>>, vector<8x1xf32>,
    } else {
    }
    %c0 = arith.constant 0 : index
    %c0_1 = arith.constant 0 : index
    %3 = vector.load %arg2[%c0, %c0_1] : memref<8x32xf32, #tpu.memory_space<vmem>>, vector<8x32xf32>
    %c0_2 = arith.constant 0 : index
    %c0_3 = arith.constant 0 : index
    %4 = vector.load %arg3[%c0_2, %c0_3] : memref<32x1xf32, #tpu.memory_space<vmem>>, vector<32x1xf32>
    %c0_4 = arith.constant 0 : index
    %c0_5 = arith.constant 0 : index
    %5 = vector.load %arg5[%c0_4, %c0_5] : memref<8x1xf32, #tpu.memory_space<vmem>>, vector<8x1xf32>
    %cst = arith.constant dense<0.000000e+00> : vector<8x1xf32>
    %6 = tpu.matmul %3, %4, %cst {dimension_numbers = #tpu.dot_dimension_numbers<[1], [0], [0], [1], [0, 0, 1, 1], [], []>} : vector<8x32xf32>, vector<32x1xf32>, vector<8x1xf32> -> vector<8x1xf32>
    %7 = arith.addf %5, %6 : vector<8x1xf32>
    %c0_6 = arith.constant 0 : index
    %c0_7 = arith.constant 0 : index
    %8 = vector.load %arg5[%c0_6, %c0_7] : memref<8x1xf32, #tpu.memory_space<vmem>>, vector<8x1xf32>
    tpu.vector_store %arg5[%c0_6, %c0_7], %7 {strides = array<i32>} : memref<8x1xf32, #tpu.memory_space<vmem>>, vector<8x1xf32>,
    return
  }
  func.func @transform_0(%arg0: i32, %arg1: i32) -> (i32, i32) {
    %c0_i32 = arith.constant 0 : i32
    return %arg0, %arg1 : i32, i32
  }
  func.func @transform_1(%arg0: i32, %arg1: i32) -> (i32, i32) {
    %c0_i32 = arith.constant 0 : i32
    %c0_i32_0 = arith.constant 0 : i32
    return %arg1, %c0_i32 : i32, i32
  }
  func.func @transform_2(%arg0: i32, %arg1: i32) -> i32 {
    %c0_i32 = arith.constant 0 : i32
    %c0_i32_0 = arith.constant 0 : i32
    return %c0_i32 : i32
  }
  func.func @transform_3(%arg0: i32, %arg1: i32) -> (i32, i32) {
    %c0_i32 = arith.constant 0 : i32
    %c0_i32_0 = arith.constant 0 : i32
    return %arg0, %c0_i32 : i32, i32
  }
}

</mosaic_0001>

<llo_original>
// kernel: tpu_custom_call.1
$region0: #{tpu_custom_call.1}
  #allocation0 [shape = 'u32[]', space=smem, size = 0x4, offset = 0x4, fixed_abs, tag = 'smem constant byte address 0x4 - core index']
  #allocation1 [shape = 'u32[144,128]{1,0:T(1,128)}', space=vmem, size = 0x12000, scoped, tag = 'internal scratch']
  #allocation2 [shape = 'f32[1]{0:T(128)S(6)}', space=smem, size = 0x200, scoped, tag = 'scoped memory for tpu_custom_call.1']
  %s0 = inlined_call_operand.vmem [shape: f32[2,32], index: 0, kind: input, shape index: {}]
  %s1 = inlined_call_operand.vmem [shape: f32[32,1], index: 1, kind: input, shape index: {}]
  %s2 = inlined_call_operand.<no memory space> [shape: f32[1], index: 2, kind: input, shape index: {}]
  %s3 = inlined_call_operand.vmem [shape: f32[2,1], index: 3, kind: output, shape index: {}]
  %s4 = sld [smem:[#allocation0]]
  $region56: #{tpu_custom_call.1} parent=0
    _
  %s6 = ssub.s32 1, %s4
  %s7 = scalar_select 0, %s6, %s4
  %8 = sst [smem:[#allocation2]] %s2
  $region1: #{tpu_custom_call.1} parent=0
    #allocation3 [shape = 'u8[4096]{0}', space=vmem, size = 0x1000, scoped, tag = 'output window, operand 0, single buffered']
    // Predicated region
    $region2: #{tpu_custom_call.1} parent=1 // pred_check
      _
    $region3: #{tpu_custom_call.1} parent=1 // pred_check_branch
      %10 = sbr.rel (0) target = $region5
    $region4: #{tpu_custom_call.1} parent=1 // pred_region
      _
    $region5: #{tpu_custom_call.1} parent=1 // pred_fallthru
      _
    // Predicated region
    $region6: #{tpu_custom_call.1} parent=1 // pred_check
      _
    $region7: #{tpu_custom_call.1} parent=1 // pred_check_branch
      %12 = sbr.rel (0) target = $region9
    $region8: #{tpu_custom_call.1} parent=1 // pred_region
      _
    $region9: #{tpu_custom_call.1} parent=1 // pred_fallthru
      _
    // Predicated region
    $region10: #{tpu_custom_call.1} parent=1 // pred_check
      _
    $region11: #{tpu_custom_call.1} parent=1 // pred_check_branch
      %14 = sbr.rel (0) target = $region13
    $region12: #{tpu_custom_call.1} parent=1 // pred_region
      _
    $region13: #{tpu_custom_call.1} parent=1 // pred_fallthru
      _
    %p15 = scmp.eq.s32.totalorder 0, 0
    // Predicated region
    $region14: #{tpu_custom_call.1} parent=1 // pred_check
      %p16 = pneg %p15
    $region15: #{tpu_custom_call.1} parent=1 // pred_check_branch
      %18 = sbr.rel (%p16) target = $region17
    $region16: #{tpu_custom_call.1} parent=1 // pred_region
      %s19 = sld [smem:[#allocation2]]
      %v20 = vstv %s19
      %vm21 = vcmask 7168
      %22 = vst.msk [vmem:[#allocation3] sm:$0xff] %vm21, %v20
    $region17: #{tpu_custom_call.1} parent=1 // pred_fallthru
      _
    %v23 = vld [vmem:[%s0] sm:$0xff]
    %v24 = vld [vmem:[%s1] sm:$0xff]
    %v25 = vld [vmem:[%s1 + $0x8] sm:$0xff]
    %v26 = vld [vmem:[%s1 + $0x10] sm:$0xff]
    %v27 = vld [vmem:[%s1 + $0x18] sm:$0xff]
    %v28 = vld [vmem:[#allocation3] sm:$0xff]
    %vm29 = vcmask 261120
    %v31 = vsel %vm29, %v23, 0
    %33 = vmatprep.subr.mxu0 0.0
    %34 = vmatpush1.msra.mxu0 0.0
    %35 = vmatprep.subr.mxu0 0.0
    %36 = vmatpush1.msra.mxu0 0.0
    %37 = vmatprep.subr.mxu0 0.0
    %38 = vmatpush1.msra.mxu0 0.0
    %39 = vmatprep.subr.mxu0 0.0
    %40 = vmatpush1.msra.mxu0 0.0
    %41 = vmatprep.subr.mxu0 0.0
    %42 = vmatpush1.msra.mxu0 0.0
    %43 = vmatprep.subr.mxu0 0.0
    %44 = vmatpush1.msra.mxu0 0.0
    %45 = vmatprep.subr.mxu0 0.0
    %46 = vmatpush1.msra.mxu0 0.0
    %47 = vmatprep.subr.mxu0 0.0
    %48 = vmatpush1.msra.mxu0 0.0
    %49 = vmatprep.subr.mxu0 0.0
    %50 = vmatpush1.msra.mxu0 0.0
    %51 = vmatprep.subr.mxu0 0.0
    %52 = vmatpush1.msra.mxu0 0.0
    %53 = vmatprep.subr.mxu0 0.0
    %54 = vmatpush1.msra.mxu0 0.0
    %55 = vmatprep.subr.mxu0 0.0
    %56 = vmatpush1.msra.mxu0 0.0
    %57 = vmatprep.subr.mxu0 0.0
    %58 = vmatpush1.msra.mxu0 %v27
    %59 = vmatprep.subr.mxu0 0.0
    %60 = vmatpush1.msra.mxu0 %v26
    %61 = vmatprep.subr.mxu0 0.0
    %62 = vmatpush1.msra.mxu0 %v25
    %63 = vmatprep.subr.mxu0 0.0
    %64 = vmatpush1.msra.mxu0 %v24
    %65 = vmatprep.subr.mxu0 0.0
    %66 = vmatpush2.msra.mxu0 0.0
    %67 = vmatprep.subr.mxu0 0.0
    %68 = vmatpush2.msra.mxu0 0.0
    %69 = vmatprep.subr.mxu0 0.0
    %70 = vmatpush2.msra.mxu0 0.0
    %71 = vmatprep.subr.mxu0 0.0
    %72 = vmatpush2.msra.mxu0 0.0
    %73 = vmatprep.subr.mxu0 0.0
    %74 = vmatpush2.msra.mxu0 0.0
    %75 = vmatprep.subr.mxu0 0.0
    %76 = vmatpush2.msra.mxu0 0.0
    %77 = vmatprep.subr.mxu0 0.0
    %78 = vmatpush2.msra.mxu0 0.0
    %79 = vmatprep.subr.mxu0 0.0
    %80 = vmatpush2.msra.mxu0 0.0
    %81 = vmatprep.subr.mxu0 0.0
    %82 = vmatpush2.msra.mxu0 0.0
    %83 = vmatprep.subr.mxu0 0.0
    %84 = vmatpush2.msra.mxu0 0.0
    %85 = vmatprep.subr.mxu0 0.0
    %86 = vmatpush2.msra.mxu0 0.0
    %87 = vmatprep.subr.mxu0 0.0
    %88 = vmatpush2.msra.mxu0 0.0
    %89 = vmatprep.subr.mxu0 0.0
    %90 = vmatpush2.msra.mxu0 0.0
    %91 = vmatprep.subr.mxu0 0.0
    %92 = vmatpush2.msra.mxu0 0.0
    %93 = vmatprep.subr.mxu0 0.0
    %94 = vmatpush2.msra.mxu0 0.0
    %95 = vmatprep.subr.mxu0 0.0
    %96 = vmatpush2.msra.mxu0 0.0
    %97 = vmatprep.mubr.f32.mxu0 0.0
    %98 = vmatmul.mubr.f32.gmra.mxu0 %v31
    %v99 = vpop.f32.mrf.mxu0
    %v100 = vadd.f32 0.0, %v99
    %v101 = vpop.f32.mrf.mxu0
    %102 = vdwg.mxu0
    %v103 = vadd.f32 %v28, %v100
    %vm104 = vcmask 7168
    %105 = vst.msk [vmem:[#allocation3] sm:$0xff] %vm104, %v103
    // Predicated region
    $region18: #{tpu_custom_call.1} parent=1 // pred_check
      _
    $region19: #{tpu_custom_call.1} parent=1 // pred_check_branch
      %107 = sbr.rel (0) target = $region21
    $region20: #{tpu_custom_call.1} parent=1 // pred_region
      // Predicated region
      $region22: #{tpu_custom_call.1} parent=20 // pred_check
        _
      $region23: #{tpu_custom_call.1} parent=20 // pred_check_branch
        %109 = sbr.rel (0) target = $region25
      $region24: #{tpu_custom_call.1} parent=20 // pred_region
        // Predicated region
        $region26: #{tpu_custom_call.1} parent=24 // pred_check
          _
        $region27: #{tpu_custom_call.1} parent=24 // pred_check_branch
          %111 = sbr.rel target = $region29
        $region28: #{tpu_custom_call.1} parent=24 // pred_region
          // Predicated region
          $region41: #{tpu_custom_call.1} parent=28 // pred_check
            _
          $region42: #{tpu_custom_call.1} parent=28 // pred_check_branch
            %127 = sbr.rel (0) target = $region44
          $region43: #{tpu_custom_call.1} parent=28 // pred_region
            %s129 = ssub.s32 4, 1
            loop: start=0, step=1, limit=1
            $region45: #{tpu_custom_call.1} parent=43 // loop_pre_header
              _
            $region46: #{tpu_custom_call.1} parent=43 // loop_header
              %s131 = sphi 0, %s135
              %p132 = scmp.ge.s32.totalorder %s131, 1
              %s136 = sphi [#allocation3], [#allocation3]
              %s137 = sphi %s3, %s3
            $region47: #{tpu_custom_call.1} parent=43 // loop_header_branch
              %134 = sbr.rel (%p132) target = $region51
            $region48: #{tpu_custom_call.1} parent=43 // loop_body
              %v138 = vld [vmem:[%s136] sm:%s129]
              %139 = vst [vmem:[%s137] sm:%s129] %v138
            $region49: #{tpu_custom_call.1} parent=43 // loop_footer
              %s135 = sadd.s32 1, %s131
            $region50: #{tpu_custom_call.1} parent=43 // loop_footer_branch
              %130 = sbr.rel target = $region46
            $region51: #{tpu_custom_call.1} parent=43 // loop_exit
              _
          $region44: #{tpu_custom_call.1} parent=28 // pred_fallthru
            _
        $region29: #{tpu_custom_call.1} parent=24 // pred_fallthru
          _
        // Predicated region
        $region30: #{tpu_custom_call.1} parent=24 // pred_check
          _
        $region31: #{tpu_custom_call.1} parent=24 // pred_check_branch
          %113 = sbr.rel (0) target = $region33
        $region32: #{tpu_custom_call.1} parent=24 // pred_region
          %s115 = ssub.s32 4, 1
          loop: start=0, step=1, limit=1
          $region34: #{tpu_custom_call.1} parent=32 // loop_pre_header
            _
          $region35: #{tpu_custom_call.1} parent=32 // loop_header
            %s117 = sphi 0, %s121
            %p118 = scmp.ge.s32.totalorder %s117, 1
            %s122 = sphi [#allocation3], [#allocation3]
            %s123 = sphi %s3, %s3
          $region36: #{tpu_custom_call.1} parent=32 // loop_header_branch
            %120 = sbr.rel (%p118) target = $region40
          $region37: #{tpu_custom_call.1} parent=32 // loop_body
            %v124 = vld [vmem:[%s122] sm:%s115]
            %125 = vst [vmem:[%s123] sm:%s115] %v124
          $region38: #{tpu_custom_call.1} parent=32 // loop_footer
            %s121 = sadd.s32 1, %s117
          $region39: #{tpu_custom_call.1} parent=32 // loop_footer_branch
            %116 = sbr.rel target = $region35
          $region40: #{tpu_custom_call.1} parent=32 // loop_exit
            _
        $region33: #{tpu_custom_call.1} parent=24 // pred_fallthru
          _
      $region25: #{tpu_custom_call.1} parent=20 // pred_fallthru
        _
      %140 = vnop
    $region21: #{tpu_custom_call.1} parent=1 // pred_fallthru
      _
    // Predicated region
    $region52: #{tpu_custom_call.1} parent=1 // pred_check
      _
    $region53: #{tpu_custom_call.1} parent=1 // pred_check_branch
      %142 = sbr.rel (0) target = $region55
    $region54: #{tpu_custom_call.1} parent=1 // pred_region
      _
    $region55: #{tpu_custom_call.1} parent=1 // pred_fallthru
      _

</llo_original>
